<compile_context>
chip_gen: v6e
topology: v6e:2x2x1
jax: 0.10.0
libtpu: 0.0.40
codegen_flags: <defaults>
</compile_context>

<pallas_src>
import jax
import jax.numpy as jnp
from jax.experimental import pallas as pl
from jax.experimental.pallas import tpu as pltpu


# --------------------------------------------------------------------------- kernels
def mlp_kernel_resident(x_ref, w1_ref, b1_ref, w2_ref, b2_ref, o_ref):
    """Whole MLP per token tile; weights fully resident in VMEM (single grid axis)."""
    x = x_ref[...].astype(w1_ref.dtype)                       # in-kernel cast (saves an HBM pass)
    h = jnp.dot(x, w1_ref[...], preferred_element_type=jnp.float32) + b1_ref[...]
    h = h * jax.nn.sigmoid(h)                                  # SiLU in f32 (EUP)
    y = jnp.dot(h.astype(w2_ref.dtype), w2_ref[...], preferred_element_type=jnp.float32)
    o_ref[...] = (y + b2_ref[...]).astype(o_ref.dtype)        # single store, caller dtype


def mlp_kernel_ktiled(x_ref, w1_ref, b1_ref, w2_ref, b2_ref, o_ref, acc_ref):
    """Fallback: K-tiling over MED with an f32 VMEM accumulator (weights too big)."""
    k = pl.program_id(1)

    @pl.when(k == 0)
    def _init():
        acc_ref[...] = jnp.zeros_like(acc_ref)

    x = x_ref[...].astype(w1_ref.dtype)
    h = jnp.dot(x, w1_ref[...], preferred_element_type=jnp.float32) + b1_ref[...]
    h = h * jax.nn.sigmoid(h)
    acc_ref[...] += jnp.dot(h.astype(w2_ref.dtype), w2_ref[...],
                            preferred_element_type=jnp.float32)

    @pl.when(k == pl.num_programs(1) - 1)
    def _finalize():
        o_ref[...] = (acc_ref[...] + b2_ref[...]).astype(o_ref.dtype)


# --------------------------------------------------------------------------- helpers
def _round_up(x, m):
    return (x + m - 1) // m * m


def _vmem_budget_bytes():
    """Generation-aware usable VMEM budget (leaves headroom for compiler scratch)."""
    cap = 128 * 1024 * 1024
    try:
        info = pltpu.get_tpu_info()
        c = getattr(info, "vmem_capacity_bytes", None)
        if c:
            cap = int(c)
    except Exception:
        pass
    if cap <= 64 * 1024 * 1024:          # v7x: 64 MiB physical per TensorCore
        return 52 * 1024 * 1024
    return 100 * 1024 * 1024             # v5e / v6e: 128 MiB physical


def _ktiled_need(tile, med_t, in_p, out_p, bpe_x, bpe_w, bpe_out):
    """VMEM bytes for one K-tiled step (double-buffered I/O, f32 acc, h copies)."""
    return (2 * tile * in_p * bpe_x                      # x blocks
            + 2 * (in_p + out_p) * med_t * bpe_w         # W1 / W2 MED slices
            + 2 * 8 * (med_t + out_p) * 4                # f32 biases, 8-sublane padded
            + 2 * tile * out_p * bpe_out                 # output blocks
            + tile * out_p * 4                           # f32 accumulator scratch
            + tile * med_t * (4 + bpe_w))                # f32 h + bf16 h copy


def _largest_med_tile(med_p, tile, in_p, out_p, bpe_x, bpe_w, bpe_out, usable):
    """Largest multiple of 256 (then 128) that divides med_p and fits the budget."""
    for step in (256, 128):
        t = (med_p // step) * step
        while t >= step:
            if med_p % t == 0 and _ktiled_need(tile, t, in_p, out_p,
                                               bpe_x, bpe_w, bpe_out) <= usable:
                return t
            t -= step
    return None


# --------------------------------------------------------------------------- wrapper
def mlp_forward(x, w1, b1, w2, b2, *, token_tile=512, compute_dtype=jnp.bfloat16,
                force_med_tile=None):
    """Fused MLP forward.

    x : (..., in_h)         float32 / bfloat16 (kept in native dtype; cast in-kernel)
    w1: (in_h, med_h)       PyTorch Linear weight, pre-transposed to (in, out)
    b1: (med_h,)
    w2: (med_h, out_h)
    b2: (out_h,)
    """
    orig_dtype = x.dtype
    lead_shape = x.shape[:-1]
    in_h = x.shape[-1]
    med_h = w1.shape[1]
    out_h = w2.shape[1]
    x2d = x.reshape(-1, in_h)
    n = x2d.shape[0]

    # lane alignment: pad feature dims to 128 (zero padding is exact: SiLU(0)=0)
    in_p, med_p, out_p = (_round_up(d, 128) for d in (in_h, med_h, out_h))

    bpe_x = jnp.dtype(orig_dtype).itemsize
    bpe_w = jnp.dtype(compute_dtype).itemsize
    bpe_out = jnp.dtype(orig_dtype).itemsize

    budget = _vmem_budget_bytes()
    usable = int(budget * 0.85)

    # ---- token tile: multiple of 16 (bf16 sublanes); >= 2 tiles when n > 16 so the
    #      "parallel" token axis can shard across v7x's two TensorCores.
    max_tile = min(token_tile, _round_up(n, 16))
    if n > 16:
        max_tile = min(max_tile, _round_up(-(-n // 2), 16))
    max_tile = max(16, max_tile)

    # ---- residency plan: fixed weight/bias footprint + per-token-row footprint
    fixed = 2 * (in_p * med_p + med_p * out_p) * bpe_w + 2 * 8 * (med_p + out_p) * 4
    per_tok = 2 * in_p * bpe_x + 2 * out_p * bpe_out + med_p * (4 + bpe_w)

    if force_med_tile is not None:                       # testing / debug knob
        assert med_p % force_med_tile == 0 and force_med_tile % 128 == 0
        resident, tile, med_t = False, max_tile, force_med_tile
    elif usable > fixed and (usable - fixed) // per_tok >= 16:
        resident = True
        tile = max(16, min(max_tile, ((usable - fixed) // per_tok) // 16 * 16))
        med_t = med_p
    else:
        resident = False
        tile = min(1024, _round_up(n, 16))               # bigger tile when K-tiling
        med_t = None
        while med_t is None:
            med_t = _largest_med_tile(med_p, tile, in_p, out_p,
                                      bpe_x, bpe_w, bpe_out, usable)
            if med_t is None:
                if tile <= 16:
                    med_t = 128                          # last resort
                else:
                    tile = max(16, (tile // 2) // 16 * 16)

    n_p = _round_up(n, tile)
    grid_tok = n_p // tile

    # ---- cast / pad operands (skip when already aligned; x stays in native dtype)
    xp = x2d
    if (n_p, in_p) != (n, in_h):
        xp = jnp.pad(xp, ((0, n_p - n), (0, in_p - in_h)))
    w1c = w1.astype(compute_dtype)
    if (in_p, med_p) != tuple(w1.shape):
        w1c = jnp.pad(w1c, ((0, in_p - in_h), (0, med_p - med_h)))
    w2c = w2.astype(compute_dtype)
    if (med_p, out_p) != tuple(w2.shape):
        w2c = jnp.pad(w2c, ((0, med_p - med_h), (0, out_p - out_h)))
    b1c = jnp.pad(b1.astype(jnp.float32), (0, med_p - med_h)).reshape(1, med_p)
    b2c = jnp.pad(b2.astype(jnp.float32), (0, out_p - out_h)).reshape(1, out_p)

    # ---- accurate VMEM request + cost estimate
    if resident:
        need = fixed + per_tok * tile
    else:
        need = _ktiled_need(tile, med_t, in_p, out_p, bpe_x, bpe_w, bpe_out)
    vmem_limit = int(min(budget, max(32 * 1024 * 1024, int(need * 1.25))))

    w_passes = 1 if resident else grid_tok               # weights re-streamed per token tile
    cost = pl.CostEstimate(
        flops=2 * n_p * (in_p * med_p + med_p * out_p),
        transcendentals=n_p * med_p,
        bytes_accessed=int(n_p * in_p * bpe_x
                           + w_passes * (in_p * med_p + med_p * out_p) * bpe_w
                           + (med_p + out_p) * 4
                           + n_p * out_p * bpe_out),
    )

    out_shape = jax.ShapeDtypeStruct((n_p, out_p), orig_dtype)

    if resident:
        out = pl.pallas_call(
            mlp_kernel_resident,
            out_shape=out_shape,
            grid=(grid_tok,),
            in_specs=[
                pl.BlockSpec((tile, in_p), lambda i: (i, 0)),     # x token tile
                pl.BlockSpec((in_p, med_p), lambda i: (0, 0)),    # W1 (resident)
                pl.BlockSpec((1, med_p), lambda i: (0, 0)),       # b1 (resident)
                pl.BlockSpec((med_p, out_p), lambda i: (0, 0)),   # W2 (resident)
                pl.BlockSpec((1, out_p), lambda i: (0, 0)),       # b2 (resident)
            ],
            out_specs=pl.BlockSpec((tile, out_p), lambda i: (i, 0)),
            compiler_params=pltpu.CompilerParams(
                dimension_semantics=("parallel",),
                vmem_limit_bytes=vmem_limit),
            cost_estimate=cost,
        )(xp, w1c, b1c, w2c, b2c)
    else:
        out = pl.pallas_call(
            mlp_kernel_ktiled,
            out_shape=out_shape,
            grid=(grid_tok, med_p // med_t),
            in_specs=[
                pl.BlockSpec((tile, in_p), lambda i, k: (i, 0)),   # x (resident over k)
                pl.BlockSpec((in_p, med_t), lambda i, k: (0, k)),  # W1 MED slice
                pl.BlockSpec((1, med_t), lambda i, k: (0, k)),     # b1 MED slice
                pl.BlockSpec((med_t, out_p), lambda i, k: (k, 0)), # W2 MED slice
                pl.BlockSpec((1, out_p), lambda i, k: (0, 0)),     # b2 (replicated)
            ],
            out_specs=pl.BlockSpec((tile, out_p), lambda i, k: (i, 0)),
            scratch_shapes=[pltpu.VMEM((tile, out_p), jnp.float32)],
            compiler_params=pltpu.CompilerParams(
                dimension_semantics=("parallel", "arbitrary"),
                vmem_limit_bytes=vmem_limit),
            cost_estimate=cost,
        )(xp, w1c, b1c, w2c, b2c)

    if (n_p, out_p) != (n, out_h):
        out = out[:n, :out_h]
    return out.reshape(*lead_shape, out_h)


# --------------------------------------------------------------------------- init / reference
def init_params(key, in_h, med_h, out_h):
    """He init for the hidden layer, Xavier for the last (mirrors init_relu/init_xavier)."""
    k1, k2 = jax.random.split(key, 2)
    w1 = jax.random.normal(k1, (in_h, med_h), jnp.float32) * jnp.sqrt(2.0 / in_h)
    b1 = jnp.zeros((med_h,), jnp.float32)
    limit = jnp.sqrt(6.0 / (med_h + out_h))
    w2 = jax.random.uniform(k2, (med_h, out_h), jnp.float32, -limit, limit)
    b2 = jnp.zeros((out_h,), jnp.float32)
    return w1, b1, w2, b2


def mlp_reference(x, w1, b1, w2, b2, compute_dtype=jnp.bfloat16):
    """Pure-JAX reference with the same bf16-operand / f32-accumulate numerics."""
    xc = x.astype(compute_dtype)
    h = jnp.dot(xc, w1.astype(compute_dtype), preferred_element_type=jnp.float32) + b1
    h = h * jax.nn.sigmoid(h)
    y = jnp.dot(h.astype(compute_dtype), w2.astype(compute_dtype),
                preferred_element_type=jnp.float32) + b2
    return y.astype(x.dtype)


# --------------------------------------------------------------------------- demo
if __name__ == "__main__":
    key = jax.random.PRNGKey(0)

    # Case 1: lane-aligned shapes, >= 2 token tiles -> weight-resident fast path.
    N, IN_H, MED_H, OUT_H = 256, 128, 256, 128
    kx, kp, key = jax.random.split(key, 3)
    x = jax.random.normal(kx, (N, IN_H), jnp.float32)
    params = init_params(kp, IN_H, MED_H, OUT_H)
    out = jax.block_until_ready(mlp_forward(x, *params))
    ref = mlp_reference(x, *params)
    assert out.shape == (N, OUT_H)
    assert jnp.allclose(out, ref, atol=1e-2, rtol=1e-2), "mismatch (resident path)"

    # Case 2: small / unaligned shapes with leading dims -> padding path.
    kx2, kp2, key = jax.random.split(key, 3)
    x2 = jax.random.normal(kx2, (2, 10, 32), jnp.float32)
    p2 = init_params(kp2, 32, 64, 32)
    out2 = jax.block_until_ready(mlp_forward(x2, *p2))
    ref2 = mlp_reference(x2, *p2)
    assert out2.shape == (2, 10, 32)
    assert jnp.allclose(out2, ref2, atol=1e-2, rtol=1e-2), "mismatch (padded path)"

    # Case 3: force the K-tiled MED-reduction path to exercise the accumulator kernel.
    kx3, kp3 = jax.random.split(key)
    x3 = jax.random.normal(kx3, (64, 128), jnp.float32)
    p3 = init_params(kp3, 128, 256, 128)
    out3 = jax.block_until_ready(mlp_forward(x3, *p3, force_med_tile=128))
    ref3 = mlp_reference(x3, *p3)
    assert out3.shape == (64, 128)
    assert jnp.allclose(out3, ref3, atol=1e-2, rtol=1e-2), "mismatch (k-tiled path)"

    print("KERNEL_OK")
</pallas_src>

<mosaic_0001>
module attributes {stable_mosaic.version = 11 : i64} {
  func.func @mlp_kernel_resident(%arg0: i32, %arg1: memref<128x128xf32, #tpu.memory_space<vmem>>, %arg2: memref<128x256xbf16, #tpu.memory_space<vmem>>, %arg3: memref<1x256xf32, #tpu.memory_space<vmem>>, %arg4: memref<256x128xbf16, #tpu.memory_space<vmem>>, %arg5: memref<1x128xf32, #tpu.memory_space<vmem>>, %arg6: memref<128x128xf32, #tpu.memory_space<vmem>>) attributes {dimension_semantics = [#tpu.dimension_semantics<parallel>], iteration_bounds = array<i64: 2>, scalar_prefetch = 0 : i64, scratch_operands = 0 : i64, tpu.core_type = #tpu.core_type<tc>, window_params = [{transform_indices = @transform_0, window_bounds = array<i64: 128, 128>}, {pipeline_mode = #tpu.pipeline_mode<synchronous>, transform_indices = @transform_1, window_bounds = array<i64: 128, 256>}, {pipeline_mode = #tpu.pipeline_mode<synchronous>, transform_indices = @transform_2, window_bounds = array<i64: 1, 256>}, {pipeline_mode = #tpu.pipeline_mode<synchronous>, transform_indices = @transform_3, window_bounds = array<i64: 256, 128>}, {pipeline_mode = #tpu.pipeline_mode<synchronous>, transform_indices = @transform_4, window_bounds = array<i64: 1, 128>}, {transform_indices = @transform_5, window_bounds = array<i64: 128, 128>}]} {
    %c0 = arith.constant 0 : index
    %c0_0 = arith.constant 0 : index
    %0 = vector.load %arg1[%c0, %c0_0] : memref<128x128xf32, #tpu.memory_space<vmem>>, vector<128x128xf32>
    %1 = arith.truncf %0 : vector<128x128xf32> to vector<128x128xbf16>
    %c0_1 = arith.constant 0 : index
    %c0_2 = arith.constant 0 : index
    %2 = vector.load %arg2[%c0_1, %c0_2] : memref<128x256xbf16, #tpu.memory_space<vmem>>, vector<128x256xbf16>
    %cst = arith.constant dense<0.000000e+00> : vector<128x256xf32>
    %3 = tpu.matmul %1, %2, %cst {dimension_numbers = #tpu.dot_dimension_numbers<[1], [0], [0], [1], [0, 0, 1, 1], [], []>} : vector<128x128xbf16>, vector<128x256xbf16>, vector<128x256xf32> -> vector<128x256xf32>
    %c0_3 = arith.constant 0 : index
    %c0_4 = arith.constant 0 : index
    %4 = vector.load %arg3[%c0_3, %c0_4] : memref<1x256xf32, #tpu.memory_space<vmem>>, vector<1x256xf32>
    %5 = vector.broadcast %4 : vector<1x256xf32> to vector<128x256xf32>
    %6 = arith.addf %3, %5 : vector<128x256xf32>
    %7 = arith.negf %6 : vector<128x256xf32>
    %8 = math.exp %7 : vector<128x256xf32>
    %cst_5 = arith.constant 1.000000e+00 : f32
    %9 = vector.broadcast %cst_5 : f32 to vector<128x256xf32>
    %10 = arith.addf %9, %8 : vector<128x256xf32>
    %11 = arith.divf %9, %10 : vector<128x256xf32>
    %12 = arith.mulf %6, %11 : vector<128x256xf32>
    %13 = arith.truncf %12 : vector<128x256xf32> to vector<128x256xbf16>
    %c0_6 = arith.constant 0 : index
    %c0_7 = arith.constant 0 : index
    %14 = vector.load %arg4[%c0_6, %c0_7] : memref<256x128xbf16, #tpu.memory_space<vmem>>, vector<256x128xbf16>
    %cst_8 = arith.constant dense<0.000000e+00> : vector<128x128xf32>
    %15 = tpu.matmul %13, %14, %cst_8 {dimension_numbers = #tpu.dot_dimension_numbers<[1], [0], [0], [1], [0, 0, 1, 1], [], []>} : vector<128x256xbf16>, vector<256x128xbf16>, vector<128x128xf32> -> vector<128x128xf32>
    %c0_9 = arith.constant 0 : index
    %c0_10 = arith.constant 0 : index
    %16 = vector.load %arg5[%c0_9, %c0_10] : memref<1x128xf32, #tpu.memory_space<vmem>>, vector<1x128xf32>
    %17 = vector.broadcast %16 : vector<1x128xf32> to vector<128x128xf32>
    %18 = arith.addf %15, %17 : vector<128x128xf32>
    %c0_11 = arith.constant 0 : index
    %c0_12 = arith.constant 0 : index
    %19 = vector.load %arg6[%c0_11, %c0_12] : memref<128x128xf32, #tpu.memory_space<vmem>>, vector<128x128xf32>
    tpu.vector_store %arg6[%c0_11, %c0_12], %18 {strides = array<i32>} : memref<128x128xf32, #tpu.memory_space<vmem>>, vector<128x128xf32>,
    return
  }
  func.func @transform_0(%arg0: i32) -> (i32, i32) {
    %c0_i32 = arith.constant 0 : i32
    %c0_i32_0 = arith.constant 0 : i32
    return %arg0, %c0_i32 : i32, i32
  }
  func.func @transform_1(%arg0: i32) -> (i32, i32) {
    %c0_i32 = arith.constant 0 : i32
    %c0_i32_0 = arith.constant 0 : i32
    %c0_i32_1 = arith.constant 0 : i32
    return %c0_i32, %c0_i32_0 : i32, i32
  }
  func.func @transform_2(%arg0: i32) -> (i32, i32) {
    %c0_i32 = arith.constant 0 : i32
    %c0_i32_0 = arith.constant 0 : i32
    %c0_i32_1 = arith.constant 0 : i32
    return %c0_i32, %c0_i32_0 : i32, i32
  }
  func.func @transform_3(%arg0: i32) -> (i32, i32) {
    %c0_i32 = arith.constant 0 : i32
    %c0_i32_0 = arith.constant 0 : i32
    %c0_i32_1 = arith.constant 0 : i32
    return %c0_i32, %c0_i32_0 : i32, i32
  }
  func.func @transform_4(%arg0: i32) -> (i32, i32) {
    %c0_i32 = arith.constant 0 : i32
    %c0_i32_0 = arith.constant 0 : i32
    %c0_i32_1 = arith.constant 0 : i32
    return %c0_i32, %c0_i32_0 : i32, i32
  }
  func.func @transform_5(%arg0: i32) -> (i32, i32) {
    %c0_i32 = arith.constant 0 : i32
    %c0_i32_0 = arith.constant 0 : i32
    return %arg0, %c0_i32 : i32, i32
  }
}

</mosaic_0001>

<llo_original>
// kernel: tpu_custom_call.1
$region0: #{tpu_custom_call.1}
  #allocation0 [shape = 'u32[]', space=smem, size = 0x4, offset = 0x4, fixed_abs, tag = 'smem constant byte address 0x4 - core index']
  #allocation1 [shape = 'u32[144,128]{1,0:T(1,128)}', space=vmem, size = 0x12000, scoped, tag = 'internal scratch']
  %s0 = inlined_call_operand.hbm [shape: f32[256,128], index: 0, kind: input, shape index: {}]
  %s1 = inlined_call_operand.hbm [shape: bf16[128,256], index: 1, kind: input, shape index: {}]
  %s2 = inlined_call_operand.vmem [shape: f32[1,256], index: 2, kind: input, shape index: {}]
  %s3 = inlined_call_operand.hbm [shape: bf16[256,128], index: 3, kind: input, shape index: {}]
  %s4 = inlined_call_operand.vmem [shape: f32[1,128], index: 4, kind: input, shape index: {}]
  %s5 = inlined_call_operand.hbm [shape: f32[256,128], index: 5, kind: output, shape index: {}]
  %s6 = sld [smem:[#allocation0]]
  $region65: #{tpu_custom_call.1} parent=0
    _
  %s8 = ssub.s32 1, %s6
  %s9 = scalar_select 0, %s8, %s6
  $region1: #{tpu_custom_call.1} parent=0
    #allocation2 [shape = 'u8[131072]{0}', space=vmem, size = 0x20000, scoped, tag = 'input window, operand 0']
    #allocation3 [shape = 's32[2]{0}', space=sflag, size = 0x8, scoped, tag = 'scoped memory for tpu_custom_call.1']
    #allocation4 [shape = 's32[2]{0}', space=sflag, size = 0x8, scoped, tag = 'scoped memory for tpu_custom_call.1']
    #allocation5 [shape = 'u8[65536]{0}', space=vmem, size = 0x10000, scoped, tag = 'input window, operand 1, single buffered']
    #allocation6 [shape = 's32[1]{0}', space=sflag, size = 0x4, scoped, tag = 'scoped memory for tpu_custom_call.1']
    #allocation7 [shape = 'u8[65536]{0}', space=vmem, size = 0x10000, scoped, tag = 'input window, operand 3, single buffered']
    #allocation8 [shape = 'u8[131072]{0}', space=vmem, size = 0x20000, scoped, tag = 'output window, operand 0']
    %10 = vsyncpa [#allocation3], 0
    %s11 = scalar_lea.sflag [#allocation3], 1
    %12 = vsyncpa %s11, 0
    %13 = vsyncpa [#allocation6], 0
    %14 = vsyncpa [#allocation4], 0
    %s15 = scalar_lea.sflag [#allocation4], 1
    %16 = vsyncpa %s15, 0
    loop: start=0, step=1, limit=4
    $region2: #{tpu_custom_call.1} parent=1 // loop_pre_header
      _
    $region3: #{tpu_custom_call.1} parent=1 // loop_header
      %s18 = sphi 0, %s22
      %p19 = scmp.ge.s32.totalorder %s18, 4
      %s28 = sphi 0, %s30
      %s31 = sphi 0, %s28
      %s32 = sphi 0, %s31
      %s48 = sphi 0, %s32
      %s52 = sphi 0, %s52
      %s54 = sphi 0, %s52
      %s55 = sphi 0, %s54
      %s69 = sphi 0, %s55
      %s73 = sphi 0, %s73
      %s75 = sphi 0, %s73
      %s76 = sphi 0, %s75
      %s90 = sphi 0, %s76
      %s94 = sphi 0, %s94
      %s96 = sphi 0, %s94
      %s97 = sphi 0, %s96
      %s111 = sphi 0, %s97
      %s115 = sphi 0, %s115
      %s117 = sphi 0, %s115
      %s118 = sphi 0, %s117
      %s132 = sphi 0, %s118
      %s138 = sphi 0, %s140
      %s141 = sphi 0, %s138
      %s142 = sphi 0, %s141
      %s158 = sphi 0, %s142
    $region4: #{tpu_custom_call.1} parent=1 // loop_header_branch
      %21 = sbr.rel (%p19) target = $region8
    $region5: #{tpu_custom_call.1} parent=1 // loop_body
      %s23 = ssub.s32 %s18, 1
      %s24 = ssub.s32 %s18, 2
      %s25 = sadd.s32 %s18, 1
      %s26 = ssub.s32 %s18, %s25
      %p27 = scmp.eq.s32.totalorder %s26, 0
      %s29 = sadd.s32 %s28, 1
      %s30 = scalar_select %p27, %s28, %s29
      %p33 = pneg %p27
      %p34 = scmp.eq.s32.totalorder %s18, 1
      %p35 = por %p33, %p34
      %p36 = scmp.ne.s32.totalorder %s28, %s31
      %p37 = scmp.eq.s32.totalorder %s18, 0
      %p38 = por %p36, %p37
      %p39 = scmp.ne.s32.totalorder %s28, %s31
      %p40 = scmp.eq.s32.totalorder %s23, 1
      %p41 = por %p39, %p40
      %p42 = scmp.ne.s32.totalorder %s31, %s32
      %p43 = scmp.eq.s32.totalorder %s23, 0
      %p44 = por %p42, %p43
      %p45 = scmp.ne.s32.totalorder %s31, %s32
      %p46 = scmp.eq.s32.totalorder %s24, 1
      %p47 = por %p45, %p46
      %p49 = scmp.ne.s32.totalorder %s32, %s48
      %p50 = scmp.eq.s32.totalorder %s24, 0
      %p51 = por %p49, %p50
      %s53 = sadd.s32 %s52, 1
      %p56 = scmp.eq.s32.totalorder %s18, 1
      %p57 = scmp.ne.s32.totalorder %s52, %s54
      %p58 = scmp.eq.s32.totalorder %s18, 0
      %p59 = por %p57, %p58
      %p60 = scmp.ne.s32.totalorder %s52, %s54
      %p61 = scmp.eq.s32.totalorder %s23, 1
      %p62 = por %p60, %p61
      %p63 = scmp.ne.s32.totalorder %s54, %s55
      %p64 = scmp.eq.s32.totalorder %s23, 0
      %p65 = por %p63, %p64
      %p66 = scmp.ne.s32.totalorder %s54, %s55
      %p67 = scmp.eq.s32.totalorder %s24, 1
      %p68 = por %p66, %p67
      %p70 = scmp.ne.s32.totalorder %s55, %s69
      %p71 = scmp.eq.s32.totalorder %s24, 0
      %p72 = por %p70, %p71
      %s74 = sadd.s32 %s73, 1
      %p77 = scmp.eq.s32.totalorder %s18, 1
      %p78 = scmp.ne.s32.totalorder %s73, %s75
      %p79 = scmp.eq.s32.totalorder %s18, 0
      %p80 = por %p78, %p79
      %p81 = scmp.ne.s32.totalorder %s73, %s75
      %p82 = scmp.eq.s32.totalorder %s23, 1
      %p83 = por %p81, %p82
      %p84 = scmp.ne.s32.totalorder %s75, %s76
      %p85 = scmp.eq.s32.totalorder %s23, 0
      %p86 = por %p84, %p85
      %p87 = scmp.ne.s32.totalorder %s75, %s76
      %p88 = scmp.eq.s32.totalorder %s24, 1
      %p89 = por %p87, %p88
      %p91 = scmp.ne.s32.totalorder %s76, %s90
      %p92 = scmp.eq.s32.totalorder %s24, 0
      %p93 = por %p91, %p92
      %s95 = sadd.s32 %s94, 1
      %p98 = scmp.eq.s32.totalorder %s18, 1
      %p99 = scmp.ne.s32.totalorder %s94, %s96
      %p100 = scmp.eq.s32.totalorder %s18, 0
      %p101 = por %p99, %p100
      %p102 = scmp.ne.s32.totalorder %s94, %s96
      %p103 = scmp.eq.s32.totalorder %s23, 1
      %p104 = por %p102, %p103
      %p105 = scmp.ne.s32.totalorder %s96, %s97
      %p106 = scmp.eq.s32.totalorder %s23, 0
      %p107 = por %p105, %p106
      %p108 = scmp.ne.s32.totalorder %s96, %s97
      %p109 = scmp.eq.s32.totalorder %s24, 1
      %p110 = por %p108, %p109
      %p112 = scmp.ne.s32.totalorder %s97, %s111
      %p113 = scmp.eq.s32.totalorder %s24, 0
      %p114 = por %p112, %p113
      %s116 = sadd.s32 %s115, 1
      %p119 = scmp.eq.s32.totalorder %s18, 1
      %p120 = scmp.ne.s32.totalorder %s115, %s117
      %p121 = scmp.eq.s32.totalorder %s18, 0
      %p122 = por %p120, %p121
      %p123 = scmp.ne.s32.totalorder %s115, %s117
      %p124 = scmp.eq.s32.totalorder %s23, 1
      %p125 = por %p123, %p124
      %p126 = scmp.ne.s32.totalorder %s117, %s118
      %p127 = scmp.eq.s32.totalorder %s23, 0
      %p128 = por %p126, %p127
      %p129 = scmp.ne.s32.totalorder %s117, %s118
      %p130 = scmp.eq.s32.totalorder %s24, 1
      %p131 = por %p129, %p130
      %p133 = scmp.ne.s32.totalorder %s118, %s132
      %p134 = scmp.eq.s32.totalorder %s24, 0
      %p135 = por %p133, %p134
      %s136 = ssub.s32 %s18, %s25
      %p137 = scmp.eq.s32.totalorder %s136, 0
      %s139 = sadd.s32 %s138, 1
      %s140 = scalar_select %p137, %s138, %s139
      %p143 = pneg %p137
      %p144 = scmp.eq.s32.totalorder %s18, 1
      %p145 = por %p143, %p144
      %p146 = scmp.ne.s32.totalorder %s138, %s141
      %p147 = scmp.eq.s32.totalorder %s18, 0
      %p148 = por %p146, %p147
      %p149 = scmp.ne.s32.totalorder %s138, %s141
      %p150 = scmp.eq.s32.totalorder %s23, 1
      %p151 = por %p149, %p150
      %p152 = scmp.ne.s32.totalorder %s141, %s142
      %p153 = scmp.eq.s32.totalorder %s23, 0
      %p154 = por %p152, %p153
      %p155 = scmp.ne.s32.totalorder %s141, %s142
      %p156 = scmp.eq.s32.totalorder %s24, 1
      %p157 = por %p155, %p156
      %p159 = scmp.ne.s32.totalorder %s142, %s158
      %p160 = scmp.eq.s32.totalorder %s24, 0
      %p161 = por %p159, %p160
      %p162 = scmp.le.s32.totalorder 1, %s18
      %p163 = scmp.lt.s32.totalorder %s18, 3
      %p164 = pnand %p162, %p163
      %p165 = pneg %p164
      // Predicated region
      $region9: #{tpu_custom_call.1} parent=5 // pred_check
        _
      $region10: #{tpu_custom_call.1} parent=5 // pred_check_branch
        %167 = sbr.rel (%p164) target = $region12
      $region11: #{tpu_custom_call.1} parent=5 // pred_region
        %s168 = ssub.s32 %s18, 1
        // Predicated region
        $region13: #{tpu_custom_call.1} parent=11 // pred_check
          %p169 = pneg %p65
        $region14: #{tpu_custom_call.1} parent=11 // pred_check_branch
          %171 = sbr.rel (%p169) target = $region16
        $region15: #{tpu_custom_call.1} parent=11 // pred_region
          %s173 = ssub.s32 2048, 2048
          %174 = vsyncadd [#allocation6], %s173
          %s175 = sshll.u32 [#allocation5], 4
          %s176 = int_to_ptr.vmem [resolvable:$true] %s175
          %181 = dma.hbm_to_vmem [thread:$0]  %s1, 2048, %s176, [#allocation6], 128, 128, 8
        $region16: #{tpu_custom_call.1} parent=11 // pred_fallthru
          _
        // Predicated region
        $region17: #{tpu_custom_call.1} parent=11 // pred_check
          %p182 = pneg %p86
        $region18: #{tpu_custom_call.1} parent=11 // pred_check_branch
          %184 = sbr.rel (%p182) target = $region20
        $region19: #{tpu_custom_call.1} parent=11 // pred_region
          _
        $region20: #{tpu_custom_call.1} parent=11 // pred_fallthru
          _
        // Predicated region
        $region21: #{tpu_custom_call.1} parent=11 // pred_check
          %p185 = pneg %p107
        $region22: #{tpu_custom_call.1} parent=11 // pred_check_branch
          %187 = sbr.rel (%p185) target = $region24
        $region23: #{tpu_custom_call.1} parent=11 // pred_region
          %s189 = ssub.s32 2048, 2048
          %190 = vsyncadd [#allocation6], %s189
          %s191 = sshll.u32 [#allocation7], 4
          %s192 = int_to_ptr.vmem [resolvable:$true] %s191
          %197 = dma.hbm_to_vmem [thread:$0]  %s3, 2048, %s192, [#allocation6], 64, 64, 4
        $region24: #{tpu_custom_call.1} parent=11 // pred_fallthru
          _
        // Predicated region
        $region25: #{tpu_custom_call.1} parent=11 // pred_check
          %p198 = pneg %p128
        $region26: #{tpu_custom_call.1} parent=11 // pred_check_branch
          %200 = sbr.rel (%p198) target = $region28
        $region27: #{tpu_custom_call.1} parent=11 // pred_region
          _
        $region28: #{tpu_custom_call.1} parent=11 // pred_fallthru
          _
      $region12: #{tpu_custom_call.1} parent=5 // pred_fallthru
        _
      %p201 = scmp.lt.s32.totalorder %s18, 2
      // Predicated region
      $region29: #{tpu_custom_call.1} parent=5 // pred_check
        %p202 = pneg %p201
      $region30: #{tpu_custom_call.1} parent=5 // pred_check_branch
        %204 = sbr.rel (%p202) target = $region32
      $region31: #{tpu_custom_call.1} parent=5 // pred_region
        // Predicated region
        $region33: #{tpu_custom_call.1} parent=31 // pred_check
          %p205 = pneg %p38
        $region34: #{tpu_custom_call.1} parent=31 // pred_check_branch
          %207 = sbr.rel (%p205) target = $region36
        $region35: #{tpu_custom_call.1} parent=31 // pred_region
          %s208 = sand.u32 %s28, 1
          %s209 = scalar_lea.sflag [#allocation3], %s208
          %s210 = sand.u32 %s28, 1
          %s211 = smul.addr %s210, 128
          %s212 = scalar_lea.vmem [#allocation2], %s211
          %s213 = smul.u32 16, %s18
          %s215 = ssub.s32 2048, 2048
          %216 = vsyncadd %s209, %s215
          %s217 = smul.addr %s213, 128
          %s218 = scalar_lea.hbm %s0, %s217
          %s219 = sshll.u32 %s212, 4
          %s220 = int_to_ptr.vmem [resolvable:$true] %s219
          %225 = dma.hbm_to_vmem [thread:$0]  %s218, 2048, %s220, %s209, 128, 128, 8
        $region36: #{tpu_custom_call.1} parent=31 // pred_fallthru
          _
      $region32: #{tpu_custom_call.1} parent=5 // pred_fallthru
        _
      %p226 = scmp.le.s32.totalorder 1, %s18
      %p227 = scmp.lt.s32.totalorder %s18, 3
      %p228 = pnand %p226, %p227
      %p229 = pneg %p228
      // Predicated region
      $region37: #{tpu_custom_call.1} parent=5 // pred_check
        _
      $region38: #{tpu_custom_call.1} parent=5 // pred_check_branch
        %231 = sbr.rel (%p228) target = $region40
      $region39: #{tpu_custom_call.1} parent=5 // pred_region
        %s232 = ssub.s32 %s18, 1
        %s233 = sand.u32 %s31, 1
        %s234 = scalar_lea.sflag [#allocation3], %s233
        %s235 = sand.u32 %s31, 1
        %s236 = smul.addr %s235, 128
        %s237 = scalar_lea.vmem [#allocation2], %s236
        // Predicated region
        $region41: #{tpu_custom_call.1} parent=39 // pred_check
          %p238 = pneg %p44
        $region42: #{tpu_custom_call.1} parent=39 // pred_check_branch
          %240 = sbr.rel (%p238) target = $region44
        $region43: #{tpu_custom_call.1} parent=39 // pred_region
          %241 = dma.done %s234, 2048
        $region44: #{tpu_custom_call.1} parent=39 // pred_fallthru
          _
        // Predicated region
        $region45: #{tpu_custom_call.1} parent=39 // pred_check
          %p242 = pneg %p65
        $region46: #{tpu_custom_call.1} parent=39 // pred_check_branch
          %244 = sbr.rel (%p242) target = $region48
        $region47: #{tpu_custom_call.1} parent=39 // pred_region
          %245 = dma.done [#allocation6], 2048
        $region48: #{tpu_custom_call.1} parent=39 // pred_fallthru
          _
        // Predicated region
        $region49: #{tpu_custom_call.1} parent=39 // pred_check
          %p246 = pneg %p107
        $region50: #{tpu_custom_call.1} parent=39 // pred_check_branch
          %248 = sbr.rel (%p246) target = $region52
        $region51: #{tpu_custom_call.1} parent=39 // pred_region
          %249 = dma.done [#allocation6], 2048
        $region52: #{tpu_custom_call.1} parent=39 // pred_fallthru
          _
        %s250 = sand.u32 %s31, 1
        %s251 = scalar_lea.sflag [#allocation3], %s250
        %s252 = sand.u32 %s31, 1
        %s253 = smul.addr %s252, 128
        %s254 = scalar_lea.vmem [#allocation2], %s253
        %p255 = pneg %p44
        %p256 = pneg %p41
        %p257 = pneg %p65
        %p258 = pneg %p62
        %p259 = pneg %p86
        %p260 = pneg %p83
        %p261 = pneg %p107
        %p262 = pneg %p104
        %p263 = pneg %p128
        %p264 = pneg %p125
        %p265 = pneg %p154
        %p266 = pneg %p151
        %s267 = sand.u32 %s141, 1
        %s268 = scalar_lea.sflag [#allocation4], %s267
        %s269 = sand.u32 %s141, 1
        %s270 = smul.addr %s269, 128
        %s271 = scalar_lea.vmem [#allocation8], %s270
        %s272 = smul.u32 16, %s23
        %s273 = smul.u32 16, %s23
        %v275 = vld [vmem:[%s237] sm:$0xff]
        %v276 = vld [vmem:[%s237 + $0x8] sm:$0xff]
        %v277 = vld [vmem:[%s237 + $0x10] sm:$0xff]
        %v278 = vld [vmem:[%s237 + $0x18] sm:$0xff]
        %v279 = vld [vmem:[%s237 + $0x20] sm:$0xff]
        %v280 = vld [vmem:[%s237 + $0x28] sm:$0xff]
        %v281 = vld [vmem:[%s237 + $0x30] sm:$0xff]
        %v282 = vld [vmem:[%s237 + $0x38] sm:$0xff]
        %v283 = vld [vmem:[%s237 + $0x40] sm:$0xff]
        %v284 = vld [vmem:[%s237 + $0x48] sm:$0xff]
        %v285 = vld [vmem:[%s237 + $0x50] sm:$0xff]
        %v286 = vld [vmem:[%s237 + $0x58] sm:$0xff]
        %v287 = vld [vmem:[%s237 + $0x60] sm:$0xff]
        %v288 = vld [vmem:[%s237 + $0x68] sm:$0xff]
        %v289 = vld [vmem:[%s237 + $0x70] sm:$0xff]
        %v290 = vld [vmem:[%s237 + $0x78] sm:$0xff]
        %v291 = vpack.c.bf16 %v276, %v275
        %v292 = vpack.c.bf16 %v278, %v277
        %v293 = vpack.c.bf16 %v280, %v279
        %v294 = vpack.c.bf16 %v282, %v281
        %v295 = vpack.c.bf16 %v284, %v283
        %v296 = vpack.c.bf16 %v286, %v285
        %v297 = vpack.c.bf16 %v288, %v287
        %v298 = vpack.c.bf16 %v290, %v289
        %v299 = vld [vmem:[#allocation5] sm:$0xff]
        %v300 = vld [vmem:[#allocation5 + $0x8] sm:$0xff]
        %v301 = vld [vmem:[#allocation5 + $0x10] sm:$0xff]
        %v302 = vld [vmem:[#allocation5 + $0x18] sm:$0xff]
        %v303 = vld [vmem:[#allocation5 + $0x20] sm:$0xff]
        %v304 = vld [vmem:[#allocation5 + $0x28] sm:$0xff]
        %v305 = vld [vmem:[#allocation5 + $0x30] sm:$0xff]
        %v306 = vld [vmem:[#allocation5 + $0x38] sm:$0xff]
        %v307 = vld [vmem:[#allocation5 + $0x40] sm:$0xff]
        %v308 = vld [vmem:[#allocation5 + $0x48] sm:$0xff]
        %v309 = vld [vmem:[#allocation5 + $0x50] sm:$0xff]
        %v310 = vld [vmem:[#allocation5 + $0x58] sm:$0xff]
        %v311 = vld [vmem:[#allocation5 + $0x60] sm:$0xff]
        %v312 = vld [vmem:[#allocation5 + $0x68] sm:$0xff]
        %v313 = vld [vmem:[#allocation5 + $0x70] sm:$0xff]
        %v314 = vld [vmem:[#allocation5 + $0x78] sm:$0xff]
        %v315 = vld [vmem:[%s2] sm:$0x3]
        %v317 = vlaneseq
        %v318 = vshrl.u32 %v317, 7
        %v319 = vsub.s32 0, %v318
        %v320 = vrot.slane %v315, %v319
        %v321 = vlaneseq
        %v322 = vshrl.u32 %v321, 7
        %v323 = vsub.s32 1, %v322
        %v324 = vrot.slane %v315, %v323
        %v343 = vunpack.c.l.b16 %v299
        %v344 = vunpack.c.h.b16 %v299
        %v345 = vunpack.c.l.b16 %v300
        %v346 = vunpack.c.h.b16 %v300
        %v347 = vunpack.c.l.b16 %v301
        %v348 = vunpack.c.h.b16 %v301
        %v349 = vunpack.c.l.b16 %v302
        %v350 = vunpack.c.h.b16 %v302
        %v351 = vunpack.c.l.b16 %v303
        %v352 = vunpack.c.h.b16 %v303
        %v353 = vunpack.c.l.b16 %v304
        %v354 = vunpack.c.h.b16 %v304
        %v355 = vunpack.c.l.b16 %v305
        %v356 = vunpack.c.h.b16 %v305
        %v357 = vunpack.c.l.b16 %v306
        %v358 = vunpack.c.h.b16 %v306
        %v359 = vunpack.c.l.b16 %v307
        %v360 = vunpack.c.h.b16 %v307
        %v361 = vunpack.c.l.b16 %v308
        %v362 = vunpack.c.h.b16 %v308
        %v363 = vunpack.c.l.b16 %v309
        %v364 = vunpack.c.h.b16 %v309
        %v365 = vunpack.c.l.b16 %v310
        %v366 = vunpack.c.h.b16 %v310
        %v367 = vunpack.c.l.b16 %v311
        %v368 = vunpack.c.h.b16 %v311
        %v369 = vunpack.c.l.b16 %v312
        %v370 = vunpack.c.h.b16 %v312
        %v371 = vunpack.c.l.b16 %v313
        %v372 = vunpack.c.h.b16 %v313
        %v373 = vunpack.c.l.b16 %v314
        %v374 = vunpack.c.h.b16 %v314
        %v375 = vpack.c.b16 %v345, %v343
        %v376 = vpack.c.b16 %v346, %v344
        %v377 = vpack.c.b16 %v349, %v347
        %v378 = vpack.c.b16 %v350, %v348
        %v379 = vpack.c.b16 %v353, %v351
        %v380 = vpack.c.b16 %v354, %v352
        %v381 = vpack.c.b16 %v357, %v355
        %v382 = vpack.c.b16 %v358, %v356
        %v383 = vpack.c.b16 %v361, %v359
        %v384 = vpack.c.b16 %v362, %v360
        %v385 = vpack.c.b16 %v365, %v363
        %v386 = vpack.c.b16 %v366, %v364
        %v387 = vpack.c.b16 %v369, %v367
        %v388 = vpack.c.b16 %v370, %v368
        %v389 = vpack.c.b16 %v373, %v371
        %v390 = vpack.c.b16 %v374, %v372
        %407 = vmatprep.subr.bf16.mxu0 %v390
        %408 = vmatpush1.bf16.msra.mxu0 %v389
        %409 = vmatprep.subr.bf16.mxu0 %v388
        %410 = vmatpush1.bf16.msra.mxu0 %v387
        %411 = vmatprep.subr.bf16.mxu0 %v386
        %412 = vmatpush1.bf16.msra.mxu0 %v385
        %413 = vmatprep.subr.bf16.mxu0 %v384
        %414 = vmatpush1.bf16.msra.mxu0 %v383
        %415 = vmatprep.subr.bf16.mxu0 %v382
        %416 = vmatpush1.bf16.msra.mxu0 %v381
        %417 = vmatprep.subr.bf16.mxu0 %v380
        %418 = vmatpush1.bf16.msra.mxu0 %v379
        %419 = vmatprep.subr.bf16.mxu0 %v378
        %420 = vmatpush1.bf16.msra.mxu0 %v377
        %421 = vmatprep.subr.bf16.mxu0 %v376
        %422 = vmatpush1.bf16.msra.mxu0 %v375
        %423 = vmatprep.subr.bf16.mxu0 0
        %424 = vmatpush2.bf16.msra.mxu0 0
        %425 = vmatprep.subr.bf16.mxu0 0
        %426 = vmatpush2.bf16.msra.mxu0 0
        %427 = vmatprep.subr.bf16.mxu0 0
        %428 = vmatpush2.bf16.msra.mxu0 0
        %429 = vmatprep.subr.bf16.mxu0 0
        %430 = vmatpush2.bf16.msra.mxu0 0
        %431 = vmatprep.subr.bf16.mxu0 0
        %432 = vmatpush2.bf16.msra.mxu0 0
        %433 = vmatprep.subr.bf16.mxu0 0
        %434 = vmatpush2.bf16.msra.mxu0 0
        %435 = vmatprep.subr.bf16.mxu0 0
        %436 = vmatpush2.bf16.msra.mxu0 0
        %437 = vmatprep.subr.bf16.mxu0 0
        %438 = vmatpush2.bf16.msra.mxu0 0
        %439 = vmatprep.mubr.bf16.mxu0 0
        %440 = vmatmul.mubr.bf16.gmra.mxu0 %v291
        %v441 = vpop.f32.mrf.mxu0
        %v442 = vadd.f32 %v320, %v441
        %v443 = vpop.f32.mrf.mxu0
        %v444 = vadd.f32 %v324, %v443
        %v445 = vpop.f32.mrf.mxu0
        %v446 = vadd.f32 %v320, %v445
        %v447 = vpop.f32.mrf.mxu0
        %v448 = vadd.f32 %v324, %v447
        %449 = vmatprep.mubr.bf16.mxu0 0
        %450 = vmatmul.mubr.bf16.gmra.mxu0 %v292
        %v451 = vpop.f32.mrf.mxu0
        %v452 = vadd.f32 %v320, %v451
        %v453 = vpop.f32.mrf.mxu0
        %v454 = vadd.f32 %v324, %v453
        %v455 = vpop.f32.mrf.mxu0
        %v456 = vadd.f32 %v320, %v455
        %v457 = vpop.f32.mrf.mxu0
        %v458 = vadd.f32 %v324, %v457
        %459 = vmatprep.mubr.bf16.mxu0 0
        %460 = vmatmul.mubr.bf16.gmra.mxu0 %v293
        %v461 = vpop.f32.mrf.mxu0
        %v462 = vadd.f32 %v320, %v461
        %v463 = vpop.f32.mrf.mxu0
        %v464 = vadd.f32 %v324, %v463
        %v465 = vpop.f32.mrf.mxu0
        %v466 = vadd.f32 %v320, %v465
        %v467 = vpop.f32.mrf.mxu0
        %v468 = vadd.f32 %v324, %v467
        %469 = vmatprep.mubr.bf16.mxu0 0
        %470 = vmatmul.mubr.bf16.gmra.mxu0 %v294
        %v471 = vpop.f32.mrf.mxu0
        %v472 = vadd.f32 %v320, %v471
        %v473 = vpop.f32.mrf.mxu0
        %v474 = vadd.f32 %v324, %v473
        %v475 = vpop.f32.mrf.mxu0
        %v476 = vadd.f32 %v320, %v475
        %v477 = vpop.f32.mrf.mxu0
        %v478 = vadd.f32 %v324, %v477
        %479 = vmatprep.mubr.bf16.mxu0 0
        %480 = vmatmul.mubr.bf16.gmra.mxu0 %v295
        %v481 = vpop.f32.mrf.mxu0
        %v482 = vadd.f32 %v320, %v481
        %v483 = vpop.f32.mrf.mxu0
        %v484 = vadd.f32 %v324, %v483
        %v485 = vpop.f32.mrf.mxu0
        %v486 = vadd.f32 %v320, %v485
        %v487 = vpop.f32.mrf.mxu0
        %v488 = vadd.f32 %v324, %v487
        %489 = vmatprep.mubr.bf16.mxu0 0
        %490 = vmatmul.mubr.bf16.gmra.mxu0 %v296
        %v491 = vpop.f32.mrf.mxu0
        %v492 = vadd.f32 %v320, %v491
        %v493 = vpop.f32.mrf.mxu0
        %v494 = vadd.f32 %v324, %v493
        %v495 = vpop.f32.mrf.mxu0
        %v496 = vadd.f32 %v320, %v495
        %v497 = vpop.f32.mrf.mxu0
        %v498 = vadd.f32 %v324, %v497
        %499 = vmatprep.mubr.bf16.mxu0 0
        %500 = vmatmul.mubr.bf16.gmra.mxu0 %v297
        %v501 = vpop.f32.mrf.mxu0
        %v502 = vadd.f32 %v320, %v501
        %v503 = vpop.f32.mrf.mxu0
        %v504 = vadd.f32 %v324, %v503
        %v505 = vpop.f32.mrf.mxu0
        %v506 = vadd.f32 %v320, %v505
        %v507 = vpop.f32.mrf.mxu0
        %v508 = vadd.f32 %v324, %v507
        %509 = vmatprep.mubr.bf16.mxu0 0
        %510 = vmatmul.mubr.bf16.gmra.mxu0 %v298
        %v511 = vpop.f32.mrf.mxu0
        %v512 = vadd.f32 %v320, %v511
        %v513 = vpop.f32.mrf.mxu0
        %v514 = vadd.f32 %v324, %v513
        %v515 = vpop.f32.mrf.mxu0
        %v516 = vadd.f32 %v320, %v515
        %v517 = vpop.f32.mrf.mxu0
        %v518 = vadd.f32 %v324, %v517
        %519 = vdwg.mxu0
        %v520 = vxor.u32 %v442, 2147483648
        %v521 = vxor.u32 %v444, 2147483648
        %v522 = vxor.u32 %v446, 2147483648
        %v523 = vxor.u32 %v448, 2147483648
        %v524 = vxor.u32 %v452, 2147483648
        %v525 = vxor.u32 %v454, 2147483648
        %v526 = vxor.u32 %v456, 2147483648
        %v527 = vxor.u32 %v458, 2147483648
        %v528 = vxor.u32 %v462, 2147483648
        %v529 = vxor.u32 %v464, 2147483648
        %v530 = vxor.u32 %v466, 2147483648
        %v531 = vxor.u32 %v468, 2147483648
        %v532 = vxor.u32 %v472, 2147483648
        %v533 = vxor.u32 %v474, 2147483648
        %v534 = vxor.u32 %v476, 2147483648
        %v535 = vxor.u32 %v478, 2147483648
        %v536 = vxor.u32 %v482, 2147483648
        %v537 = vxor.u32 %v484, 2147483648
        %v538 = vxor.u32 %v486, 2147483648
        %v539 = vxor.u32 %v488, 2147483648
        %v540 = vxor.u32 %v492, 2147483648
        %v541 = vxor.u32 %v494, 2147483648
        %v542 = vxor.u32 %v496, 2147483648
        %v543 = vxor.u32 %v498, 2147483648
        %v544 = vxor.u32 %v502, 2147483648
        %v545 = vxor.u32 %v504, 2147483648
        %v546 = vxor.u32 %v506, 2147483648
        %v547 = vxor.u32 %v508, 2147483648
        %v548 = vxor.u32 %v512, 2147483648
        %v549 = vxor.u32 %v514, 2147483648
        %v550 = vxor.u32 %v516, 2147483648
        %v551 = vxor.u32 %v518, 2147483648
        %v552 = vmul.f32 %v520, 1.442695
        %v553 = vpow.pop %v552
        %v554 = vmul.f32 %v521, 1.442695
        %v555 = vpow.pop %v554
        %v556 = vmul.f32 %v522, 1.442695
        %v557 = vpow.pop %v556
        %v558 = vmul.f32 %v523, 1.442695
        %v559 = vpow.pop %v558
        %v560 = vmul.f32 %v524, 1.442695
        %v561 = vpow.pop %v560
        %v562 = vmul.f32 %v525, 1.442695
        %v563 = vpow.pop %v562
        %v564 = vmul.f32 %v526, 1.442695
        %v565 = vpow.pop %v564
        %v566 = vmul.f32 %v527, 1.442695
        %v567 = vpow.pop %v566
        %v568 = vmul.f32 %v528, 1.442695
        %v569 = vpow.pop %v568
        %v570 = vmul.f32 %v529, 1.442695
        %v571 = vpow.pop %v570
        %v572 = vmul.f32 %v530, 1.442695
        %v573 = vpow.pop %v572
        %v574 = vmul.f32 %v531, 1.442695
        %v575 = vpow.pop %v574
        %v576 = vmul.f32 %v532, 1.442695
        %v577 = vpow.pop %v576
        %v578 = vmul.f32 %v533, 1.442695
        %v579 = vpow.pop %v578
        %v580 = vmul.f32 %v534, 1.442695
        %v581 = vpow.pop %v580
        %v582 = vmul.f32 %v535, 1.442695
        %v583 = vpow.pop %v582
        %v584 = vmul.f32 %v536, 1.442695
        %v585 = vpow.pop %v584
        %v586 = vmul.f32 %v537, 1.442695
        %v587 = vpow.pop %v586
        %v588 = vmul.f32 %v538, 1.442695
        %v589 = vpow.pop %v588
        %v590 = vmul.f32 %v539, 1.442695
        %v591 = vpow.pop %v590
        %v592 = vmul.f32 %v540, 1.442695
        %v593 = vpow.pop %v592
        %v594 = vmul.f32 %v541, 1.442695
        %v595 = vpow.pop %v594
        %v596 = vmul.f32 %v542, 1.442695
        %v597 = vpow.pop %v596
        %v598 = vmul.f32 %v543, 1.442695
        %v599 = vpow.pop %v598
        %v600 = vmul.f32 %v544, 1.442695
        %v601 = vpow.pop %v600
        %v602 = vmul.f32 %v545, 1.442695
        %v603 = vpow.pop %v602
        %v604 = vmul.f32 %v546, 1.442695
        %v605 = vpow.pop %v604
        %v606 = vmul.f32 %v547, 1.442695
        %v607 = vpow.pop %v606
        %v608 = vmul.f32 %v548, 1.442695
        %v609 = vpow.pop %v608
        %v610 = vmul.f32 %v549, 1.442695
        %v611 = vpow.pop %v610
        %v612 = vmul.f32 %v550, 1.442695
        %v613 = vpow.pop %v612
        %v614 = vmul.f32 %v551, 1.442695
        %v615 = vpow.pop %v614
        %v616 = vadd.f32 %v553, 1.0
        %v617 = vadd.f32 %v555, 1.0
        %v618 = vadd.f32 %v557, 1.0
        %v619 = vadd.f32 %v559, 1.0
        %v620 = vadd.f32 %v561, 1.0
        %v621 = vadd.f32 %v563, 1.0
        %v622 = vadd.f32 %v565, 1.0
        %v623 = vadd.f32 %v567, 1.0
        %v624 = vadd.f32 %v569, 1.0
        %v625 = vadd.f32 %v571, 1.0
        %v626 = vadd.f32 %v573, 1.0
        %v627 = vadd.f32 %v575, 1.0
        %v628 = vadd.f32 %v577, 1.0
        %v629 = vadd.f32 %v579, 1.0
        %v630 = vadd.f32 %v581, 1.0
        %v631 = vadd.f32 %v583, 1.0
        %v632 = vadd.f32 %v585, 1.0
        %v633 = vadd.f32 %v587, 1.0
        %v634 = vadd.f32 %v589, 1.0
        %v635 = vadd.f32 %v591, 1.0
        %v636 = vadd.f32 %v593, 1.0
        %v637 = vadd.f32 %v595, 1.0
        %v638 = vadd.f32 %v597, 1.0
        %v639 = vadd.f32 %v599, 1.0
        %v640 = vadd.f32 %v601, 1.0
        %v641 = vadd.f32 %v603, 1.0
        %v642 = vadd.f32 %v605, 1.0
        %v643 = vadd.f32 %v607, 1.0
        %v644 = vadd.f32 %v609, 1.0
        %v645 = vadd.f32 %v611, 1.0
        %v646 = vadd.f32 %v613, 1.0
        %v647 = vadd.f32 %v615, 1.0
        %v648 = vrcp.pop %v616
        %v649 = vmul.f32 1.0, %v648
        %v650 = vrcp.pop %v617
        %v651 = vmul.f32 1.0, %v650
        %v652 = vrcp.pop %v618
        %v653 = vmul.f32 1.0, %v652
        %v654 = vrcp.pop %v619
        %v655 = vmul.f32 1.0, %v654
        %v656 = vrcp.pop %v620
        %v657 = vmul.f32 1.0, %v656
        %v658 = vrcp.pop %v621
        %v659 = vmul.f32 1.0, %v658
        %v660 = vrcp.pop %v622
        %v661 = vmul.f32 1.0, %v660
        %v662 = vrcp.pop %v623
        %v663 = vmul.f32 1.0, %v662
        %v664 = vrcp.pop %v624
        %v665 = vmul.f32 1.0, %v664
        %v666 = vrcp.pop %v625
        %v667 = vmul.f32 1.0, %v666
        %v668 = vrcp.pop %v626
        %v669 = vmul.f32 1.0, %v668
        %v670 = vrcp.pop %v627
        %v671 = vmul.f32 1.0, %v670
        %v672 = vrcp.pop %v628
        %v673 = vmul.f32 1.0, %v672
        %v674 = vrcp.pop %v629
        %v675 = vmul.f32 1.0, %v674
        %v676 = vrcp.pop %v630
        %v677 = vmul.f32 1.0, %v676
        %v678 = vrcp.pop %v631
        %v679 = vmul.f32 1.0, %v678
        %v680 = vrcp.pop %v632
        %v681 = vmul.f32 1.0, %v680
        %v682 = vrcp.pop %v633
        %v683 = vmul.f32 1.0, %v682
        %v684 = vrcp.pop %v634
        %v685 = vmul.f32 1.0, %v684
        %v686 = vrcp.pop %v635
        %v687 = vmul.f32 1.0, %v686
        %v688 = vrcp.pop %v636
        %v689 = vmul.f32 1.0, %v688
        %v690 = vrcp.pop %v637
        %v691 = vmul.f32 1.0, %v690
        %v692 = vrcp.pop %v638
        %v693 = vmul.f32 1.0, %v692
        %v694 = vrcp.pop %v639
        %v695 = vmul.f32 1.0, %v694
        %v696 = vrcp.pop %v640
        %v697 = vmul.f32 1.0, %v696
        %v698 = vrcp.pop %v641
        %v699 = vmul.f32 1.0, %v698
        %v700 = vrcp.pop %v642
        %v701 = vmul.f32 1.0, %v700
        %v702 = vrcp.pop %v643
        %v703 = vmul.f32 1.0, %v702
        %v704 = vrcp.pop %v644
        %v705 = vmul.f32 1.0, %v704
        %v706 = vrcp.pop %v645
        %v707 = vmul.f32 1.0, %v706
        %v708 = vrcp.pop %v646
        %v709 = vmul.f32 1.0, %v708
        %v710 = vrcp.pop %v647
        %v711 = vmul.f32 1.0, %v710
        %v712 = vmul.f32 %v442, %v649
        %v713 = vmul.f32 %v444, %v651
        %v714 = vmul.f32 %v446, %v653
        %v715 = vmul.f32 %v448, %v655
        %v716 = vmul.f32 %v452, %v657
        %v717 = vmul.f32 %v454, %v659
        %v718 = vmul.f32 %v456, %v661
        %v719 = vmul.f32 %v458, %v663
        %v720 = vmul.f32 %v462, %v665
        %v721 = vmul.f32 %v464, %v667
        %v722 = vmul.f32 %v466, %v669
        %v723 = vmul.f32 %v468, %v671
        %v724 = vmul.f32 %v472, %v673
        %v725 = vmul.f32 %v474, %v675
        %v726 = vmul.f32 %v476, %v677
        %v727 = vmul.f32 %v478, %v679
        %v728 = vmul.f32 %v482, %v681
        %v729 = vmul.f32 %v484, %v683
        %v730 = vmul.f32 %v486, %v685
        %v731 = vmul.f32 %v488, %v687
        %v732 = vmul.f32 %v492, %v689
        %v733 = vmul.f32 %v494, %v691
        %v734 = vmul.f32 %v496, %v693
        %v735 = vmul.f32 %v498, %v695
        %v736 = vmul.f32 %v502, %v697
        %v737 = vmul.f32 %v504, %v699
        %v738 = vmul.f32 %v506, %v701
        %v739 = vmul.f32 %v508, %v703
        %v740 = vmul.f32 %v512, %v705
        %v741 = vmul.f32 %v514, %v707
        %v742 = vmul.f32 %v516, %v709
        %v743 = vmul.f32 %v518, %v711
        %v744 = vpack.c.bf16 %v714, %v712
        %v745 = vpack.c.bf16 %v715, %v713
        %v746 = vpack.c.bf16 %v718, %v716
        %v747 = vpack.c.bf16 %v719, %v717
        %v748 = vpack.c.bf16 %v722, %v720
        %v749 = vpack.c.bf16 %v723, %v721
        %v750 = vpack.c.bf16 %v726, %v724
        %v751 = vpack.c.bf16 %v727, %v725
        %v752 = vpack.c.bf16 %v730, %v728
        %v753 = vpack.c.bf16 %v731, %v729
        %v754 = vpack.c.bf16 %v734, %v732
        %v755 = vpack.c.bf16 %v735, %v733
        %v756 = vpack.c.bf16 %v738, %v736
        %v757 = vpack.c.bf16 %v739, %v737
        %v758 = vpack.c.bf16 %v742, %v740
        %v759 = vpack.c.bf16 %v743, %v741
        %v760 = vld [vmem:[#allocation7] sm:$0xf]
        %v761 = vld [vmem:[#allocation7 + $0x4] sm:$0xf]
        %v762 = vld [vmem:[#allocation7 + $0x8] sm:$0xf]
        %v763 = vld [vmem:[#allocation7 + $0xc] sm:$0xf]
        %v764 = vld [vmem:[#allocation7 + $0x10] sm:$0xf]
        %v765 = vld [vmem:[#allocation7 + $0x14] sm:$0xf]
        %v766 = vld [vmem:[#allocation7 + $0x18] sm:$0xf]
        %v767 = vld [vmem:[#allocation7 + $0x1c] sm:$0xf]
        %v768 = vld [vmem:[#allocation7 + $0x20] sm:$0xf]
        %v769 = vld [vmem:[#allocation7 + $0x24] sm:$0xf]
        %v770 = vld [vmem:[#allocation7 + $0x28] sm:$0xf]
        %v771 = vld [vmem:[#allocation7 + $0x2c] sm:$0xf]
        %v772 = vld [vmem:[#allocation7 + $0x30] sm:$0xf]
        %v773 = vld [vmem:[#allocation7 + $0x34] sm:$0xf]
        %v774 = vld [vmem:[#allocation7 + $0x38] sm:$0xf]
        %v775 = vld [vmem:[#allocation7 + $0x3c] sm:$0xf]
        %v776 = vld [vmem:[#allocation7 + $0x40] sm:$0xf]
        %v777 = vld [vmem:[#allocation7 + $0x44] sm:$0xf]
        %v778 = vld [vmem:[#allocation7 + $0x48] sm:$0xf]
        %v779 = vld [vmem:[#allocation7 + $0x4c] sm:$0xf]
        %v780 = vld [vmem:[#allocation7 + $0x50] sm:$0xf]
        %v781 = vld [vmem:[#allocation7 + $0x54] sm:$0xf]
        %v782 = vld [vmem:[#allocation7 + $0x58] sm:$0xf]
        %v783 = vld [vmem:[#allocation7 + $0x5c] sm:$0xf]
        %v784 = vld [vmem:[#allocation7 + $0x60] sm:$0xf]
        %v785 = vld [vmem:[#allocation7 + $0x64] sm:$0xf]
        %v786 = vld [vmem:[#allocation7 + $0x68] sm:$0xf]
        %v787 = vld [vmem:[#allocation7 + $0x6c] sm:$0xf]
        %v788 = vld [vmem:[#allocation7 + $0x70] sm:$0xf]
        %v789 = vld [vmem:[#allocation7 + $0x74] sm:$0xf]
        %v790 = vld [vmem:[#allocation7 + $0x78] sm:$0xf]
        %v791 = vld [vmem:[#allocation7 + $0x7c] sm:$0xf]
        %v792 = vld [vmem:[%s4] sm:$0x1]
        %v794 = vlaneseq
        %v795 = vshrl.u32 %v794, 7
        %v796 = vsub.s32 0, %v795
        %v797 = vrot.slane %v792, %v796
        %v831 = vunpack.c.l.b16 %v760
        %v832 = vunpack.c.l.b16 %v761
        %v833 = vunpack.c.l.b16 %v762
        %v834 = vunpack.c.l.b16 %v763
        %v835 = vunpack.c.l.b16 %v764
        %v836 = vunpack.c.l.b16 %v765
        %v837 = vunpack.c.l.b16 %v766
        %v838 = vunpack.c.l.b16 %v767
        %v839 = vunpack.c.l.b16 %v768
        %v840 = vunpack.c.l.b16 %v769
        %v841 = vunpack.c.l.b16 %v770
        %v842 = vunpack.c.l.b16 %v771
        %v843 = vunpack.c.l.b16 %v772
        %v844 = vunpack.c.l.b16 %v773
        %v845 = vunpack.c.l.b16 %v774
        %v846 = vunpack.c.l.b16 %v775
        %v847 = vunpack.c.l.b16 %v776
        %v848 = vunpack.c.l.b16 %v777
        %v849 = vunpack.c.l.b16 %v778
        %v850 = vunpack.c.l.b16 %v779
        %v851 = vunpack.c.l.b16 %v780
        %v852 = vunpack.c.l.b16 %v781
        %v853 = vunpack.c.l.b16 %v782
        %v854 = vunpack.c.l.b16 %v783
        %v855 = vunpack.c.l.b16 %v784
        %v856 = vunpack.c.l.b16 %v785
        %v857 = vunpack.c.l.b16 %v786
        %v858 = vunpack.c.l.b16 %v787
        %v859 = vunpack.c.l.b16 %v788
        %v860 = vunpack.c.l.b16 %v789
        %v861 = vunpack.c.l.b16 %v790
        %v862 = vunpack.c.l.b16 %v791
        %v863 = vpack.c.b16 %v832, %v831
        %v864 = vpack.c.b16 %v834, %v833
        %v865 = vpack.c.b16 %v836, %v835
        %v866 = vpack.c.b16 %v838, %v837
        %v867 = vpack.c.b16 %v840, %v839
        %v868 = vpack.c.b16 %v842, %v841
        %v869 = vpack.c.b16 %v844, %v843
        %v870 = vpack.c.b16 %v846, %v845
        %v871 = vpack.c.b16 %v848, %v847
        %v872 = vpack.c.b16 %v850, %v849
        %v873 = vpack.c.b16 %v852, %v851
        %v874 = vpack.c.b16 %v854, %v853
        %v875 = vpack.c.b16 %v856, %v855
        %v876 = vpack.c.b16 %v858, %v857
        %v877 = vpack.c.b16 %v860, %v859
        %v878 = vpack.c.b16 %v862, %v861
        %895 = vmatprep.subr.bf16.mxu0 0
        %896 = vmatpush1.bf16.msra.mxu0 %v870
        %897 = vmatprep.subr.bf16.mxu0 0
        %898 = vmatpush1.bf16.msra.mxu0 %v869
        %899 = vmatprep.subr.bf16.mxu0 0
        %900 = vmatpush1.bf16.msra.mxu0 %v868
        %901 = vmatprep.subr.bf16.mxu0 0
        %902 = vmatpush1.bf16.msra.mxu0 %v867
        %903 = vmatprep.subr.bf16.mxu0 0
        %904 = vmatpush1.bf16.msra.mxu0 %v866
        %905 = vmatprep.subr.bf16.mxu0 0
        %906 = vmatpush1.bf16.msra.mxu0 %v865
        %907 = vmatprep.subr.bf16.mxu0 0
        %908 = vmatpush1.bf16.msra.mxu0 %v864
        %909 = vmatprep.subr.bf16.mxu0 0
        %910 = vmatpush1.bf16.msra.mxu0 %v863
        %911 = vmatprep.subr.bf16.mxu0 0
        %912 = vmatpush2.bf16.msra.mxu0 %v878
        %913 = vmatprep.subr.bf16.mxu0 0
        %914 = vmatpush2.bf16.msra.mxu0 %v877
        %915 = vmatprep.subr.bf16.mxu0 0
        %916 = vmatpush2.bf16.msra.mxu0 %v876
        %917 = vmatprep.subr.bf16.mxu0 0
        %918 = vmatpush2.bf16.msra.mxu0 %v875
        %919 = vmatprep.subr.bf16.mxu0 0
        %920 = vmatpush2.bf16.msra.mxu0 %v874
        %921 = vmatprep.subr.bf16.mxu0 0
        %922 = vmatpush2.bf16.msra.mxu0 %v873
        %923 = vmatprep.subr.bf16.mxu0 0
        %924 = vmatpush2.bf16.msra.mxu0 %v872
        %925 = vmatprep.subr.bf16.mxu0 0
        %926 = vmatpush2.bf16.msra.mxu0 %v871
        %927 = vmatprep.mubr.bf16.mxu0 %v745
        %928 = vmatmul.mubr.bf16.gmra.mxu0 %v744
        %v929 = vpop.f32.mrf.mxu0
        %v930 = vadd.f32 %v797, %v929
        %v931 = vpop.f32.mrf.mxu0
        %v932 = vpop.f32.mrf.mxu0
        %v933 = vadd.f32 %v797, %v932
        %v934 = vpop.f32.mrf.mxu0
        %935 = vmatprep.mubr.bf16.mxu0 %v747
        %936 = vmatmul.mubr.bf16.gmra.mxu0 %v746
        %v937 = vpop.f32.mrf.mxu0
        %v938 = vadd.f32 %v797, %v937
        %v939 = vpop.f32.mrf.mxu0
        %v940 = vpop.f32.mrf.mxu0
        %v941 = vadd.f32 %v797, %v940
        %v942 = vpop.f32.mrf.mxu0
        %943 = vmatprep.mubr.bf16.mxu0 %v749
        %944 = vmatmul.mubr.bf16.gmra.mxu0 %v748
        %v945 = vpop.f32.mrf.mxu0
        %v946 = vadd.f32 %v797, %v945
        %v947 = vpop.f32.mrf.mxu0
        %v948 = vpop.f32.mrf.mxu0
        %v949 = vadd.f32 %v797, %v948
        %v950 = vpop.f32.mrf.mxu0
        %951 = vmatprep.mubr.bf16.mxu0 %v751
        %952 = vmatmul.mubr.bf16.gmra.mxu0 %v750
        %v953 = vpop.f32.mrf.mxu0
        %v954 = vadd.f32 %v797, %v953
        %v955 = vpop.f32.mrf.mxu0
        %v956 = vpop.f32.mrf.mxu0
        %v957 = vadd.f32 %v797, %v956
        %v958 = vpop.f32.mrf.mxu0
        %959 = vmatprep.mubr.bf16.mxu0 %v753
        %960 = vmatmul.mubr.bf16.gmra.mxu0 %v752
        %v961 = vpop.f32.mrf.mxu0
        %v962 = vadd.f32 %v797, %v961
        %v963 = vpop.f32.mrf.mxu0
        %v964 = vpop.f32.mrf.mxu0
        %v965 = vadd.f32 %v797, %v964
        %v966 = vpop.f32.mrf.mxu0
        %967 = vmatprep.mubr.bf16.mxu0 %v755
        %968 = vmatmul.mubr.bf16.gmra.mxu0 %v754
        %v969 = vpop.f32.mrf.mxu0
        %v970 = vadd.f32 %v797, %v969
        %v971 = vpop.f32.mrf.mxu0
        %v972 = vpop.f32.mrf.mxu0
        %v973 = vadd.f32 %v797, %v972
        %v974 = vpop.f32.mrf.mxu0
        %975 = vmatprep.mubr.bf16.mxu0 %v757
        %976 = vmatmul.mubr.bf16.gmra.mxu0 %v756
        %v977 = vpop.f32.mrf.mxu0
        %v978 = vadd.f32 %v797, %v977
        %v979 = vpop.f32.mrf.mxu0
        %v980 = vpop.f32.mrf.mxu0
        %v981 = vadd.f32 %v797, %v980
        %v982 = vpop.f32.mrf.mxu0
        %983 = vmatprep.mubr.bf16.mxu0 %v759
        %984 = vmatmul.mubr.bf16.gmra.mxu0 %v758
        %v985 = vpop.f32.mrf.mxu0
        %v986 = vadd.f32 %v797, %v985
        %v987 = vpop.f32.mrf.mxu0
        %v988 = vpop.f32.mrf.mxu0
        %v989 = vadd.f32 %v797, %v988
        %v990 = vpop.f32.mrf.mxu0
        %991 = vdwg.mxu0
        %992 = vst [vmem:[%s271] sm:$0xff] %v930
        %993 = vst [vmem:[%s271 + $0x8] sm:$0xff] %v933
        %994 = vst [vmem:[%s271 + $0x10] sm:$0xff] %v938
        %995 = vst [vmem:[%s271 + $0x18] sm:$0xff] %v941
        %996 = vst [vmem:[%s271 + $0x20] sm:$0xff] %v946
        %997 = vst [vmem:[%s271 + $0x28] sm:$0xff] %v949
        %998 = vst [vmem:[%s271 + $0x30] sm:$0xff] %v954
        %999 = vst [vmem:[%s271 + $0x38] sm:$0xff] %v957
        %1000 = vst [vmem:[%s271 + $0x40] sm:$0xff] %v962
        %1001 = vst [vmem:[%s271 + $0x48] sm:$0xff] %v965
        %1002 = vst [vmem:[%s271 + $0x50] sm:$0xff] %v970
        %1003 = vst [vmem:[%s271 + $0x58] sm:$0xff] %v973
        %1004 = vst [vmem:[%s271 + $0x60] sm:$0xff] %v978
        %1005 = vst [vmem:[%s271 + $0x68] sm:$0xff] %v981
        %1006 = vst [vmem:[%s271 + $0x70] sm:$0xff] %v986
        %1007 = vst [vmem:[%s271 + $0x78] sm:$0xff] %v989
        %s1008 = sand.u32 %s141, 1
        %s1009 = scalar_lea.sflag [#allocation4], %s1008
        %s1010 = sand.u32 %s141, 1
        %s1011 = smul.addr %s1010, 128
        %s1012 = scalar_lea.vmem [#allocation8], %s1011
        // Predicated region
        $region53: #{tpu_custom_call.1} parent=39 // pred_check
          %p1013 = pneg %p151
        $region54: #{tpu_custom_call.1} parent=39 // pred_check_branch
          %1015 = sbr.rel (%p1013) target = $region56
        $region55: #{tpu_custom_call.1} parent=39 // pred_region
          %s1016 = smul.u32 16, %s23
          %s1018 = ssub.s32 2048, 2048
          %1019 = vsyncadd %s1009, %s1018
          %s1020 = smul.addr %s1016, 128
          %s1021 = scalar_lea.hbm %s5, %s1020
          %s1022 = sshll.u32 %s1012, 4
          %s1023 = int_to_ptr.vmem [resolvable:$true] %s1022
          %1028 = dma.vmem_to_hbm [thread:$0]  %s1023, 2048, %s1021, %s1009, 128, 128, 8
        $region56: #{tpu_custom_call.1} parent=39 // pred_fallthru
          _
      $region40: #{tpu_custom_call.1} parent=5 // pred_fallthru
        _
      %p1029 = scmp.le.s32.totalorder 2, %s18
      // Predicated region
      $region57: #{tpu_custom_call.1} parent=5 // pred_check
        %p1030 = pneg %p1029
      $region58: #{tpu_custom_call.1} parent=5 // pred_check_branch
        %1032 = sbr.rel (%p1030) target = $region60
      $region59: #{tpu_custom_call.1} parent=5 // pred_region
        %s1033 = ssub.s32 %s18, 2
        // Predicated region
        $region61: #{tpu_custom_call.1} parent=59 // pred_check
          %p1034 = pneg %p157
        $region62: #{tpu_custom_call.1} parent=59 // pred_check_branch
          %1036 = sbr.rel (%p1034) target = $region64
        $region63: #{tpu_custom_call.1} parent=59 // pred_region
          %s1037 = sand.u32 %s142, 1
          %s1038 = scalar_lea.sflag [#allocation4], %s1037
          %s1039 = sand.u32 %s142, 1
          %s1040 = smul.addr %s1039, 128
          %s1041 = scalar_lea.vmem [#allocation8], %s1040
          %1042 = dma.done %s1038, 2048
        $region64: #{tpu_custom_call.1} parent=59 // pred_fallthru
          _
      $region60: #{tpu_custom_call.1} parent=5 // pred_fallthru
        _
    $region6: #{tpu_custom_call.1} parent=1 // loop_footer
      %s22 = sadd.s32 1, %s18
    $region7: #{tpu_custom_call.1} parent=1 // loop_footer_branch
      %17 = sbr.rel target = $region3
    $region8: #{tpu_custom_call.1} parent=1 // loop_exit
      _
    %1043 = vsyncpa [#allocation3], 1
    %s1044 = scalar_lea.sflag [#allocation3], 1
    %1045 = vsyncpa %s1044, 1
    %1046 = vsyncpa [#allocation6], 1
    %1047 = vsyncpa [#allocation4], 1
    %s1048 = scalar_lea.sflag [#allocation4], 1
    %1049 = vsyncpa %s1048, 1

</llo_original>
